<compile_context>
chip_gen: v7x
topology: tpu7x:2x2x1
jax: 0.10.0
libtpu: 0.0.40
codegen_flags: <defaults>
</compile_context>

<pallas_src>
import jax
import jax.numpy as jnp
from jax.experimental import pallas as pl
from jax.experimental.pallas import tpu as pltpu


NEG_SLOPE = 0.2      # LeakyReLU(0.2)
LANE = 128           # lane width / MXU column granularity
SUBLANE = 8


def _round_up(n, m):
    return ((n + m - 1) // m) * m


def _leaky_relu(h):
    return jnp.where(h > 0, h, NEG_SLOPE * h)


# ---------------------------------------------------------------------------
# Kernel: fused 3x (Linear + LeakyReLU) + final Linear on one batch tile.
# ---------------------------------------------------------------------------
def disnet_kernel(x_ref,
                  w0_ref, b0_ref,
                  w1_ref, b1_ref,
                  w2_ref, b2_ref,
                  w3_ref, b3_ref,
                  o_ref):
    def linear(h, w_ref, b_ref):
        # bf16 MXU operands, f32 accumulation; bias add stays f32.
        return (jnp.dot(h.astype(w_ref.dtype), w_ref[...],
                        preferred_element_type=jnp.float32)
                + b_ref[...])

    h = x_ref[...].astype(jnp.float32)
    h = _leaky_relu(linear(h, w0_ref, b0_ref))
    h = _leaky_relu(linear(h, w1_ref, b1_ref))
    h = _leaky_relu(linear(h, w2_ref, b2_ref))
    o_ref[...] = linear(h, w3_ref, b3_ref).astype(o_ref.dtype)


# ---------------------------------------------------------------------------
# One-time parameter preparation (hoisted out of the per-call path):
# transpose to (in, out), zero-pad both dims to 128 multiples, cast W to bf16.
# ---------------------------------------------------------------------------
def prepare_params(params, weights_dtype=jnp.bfloat16):
    """params: list of (W, b) with W shaped (out, in), b shaped (out,) — PyTorch style."""
    dims_in = [jnp.asarray(w).shape[1] for w, _ in params]
    dims_out = [jnp.asarray(w).shape[0] for w, _ in params]
    pad_in = [_round_up(d, LANE) for d in dims_in]
    pad_out = [_round_up(d, LANE) for d in dims_out]

    flat = []
    for (w, b), pin, pout in zip(params, pad_in, pad_out):
        wt = jnp.asarray(w, jnp.float32).T                      # (in, out)
        wp = jnp.zeros((pin, pout), jnp.float32)
        wp = wp.at[: wt.shape[0], : wt.shape[1]].set(wt)
        bp = jnp.zeros((1, pout), jnp.float32)
        bp = bp.at[0, : jnp.asarray(b).shape[0]].set(jnp.asarray(b, jnp.float32))
        flat.append(wp.astype(weights_dtype))                   # bf16 weights
        flat.append(bp)                                         # f32 biases
    return {
        "flat": tuple(flat),
        "z_dim": dims_in[0],
        "z_pad": pad_in[0],
        "c_out": dims_out[-1],
        "c_pad": pad_out[-1],
    }


# ---------------------------------------------------------------------------
# Forward wrapper: pads batch/features, tiles the batch axis, slices back.
# ---------------------------------------------------------------------------
def disnet_forward(x, prepared, *, block_rows=512):
    B, Z = x.shape
    zp, cp, C = prepared["z_pad"], prepared["c_pad"], prepared["c_out"]
    flat = prepared["flat"]

    # Batch tile: large for throughput (>=512 rows amortizes per-step overhead),
    # but never larger than the (sublane-rounded) batch itself.
    tm = min(block_rows, _round_up(B, SUBLANE))
    bp = _round_up(B, tm)

    # Lane-dense, zero-padded input slab.
    xp = jnp.zeros((bp, zp), x.dtype).at[:B, :Z].set(x)

    grid = (bp // tm,)

    in_specs = [pl.BlockSpec((tm, zp), lambda i: (i, 0))]
    for arr in flat:
        # Constant index_map -> weight/bias block stays resident across grid steps.
        in_specs.append(pl.BlockSpec(arr.shape, lambda i: (0, 0)))
    out_specs = pl.BlockSpec((tm, cp), lambda i: (i, 0))

    flops = 0
    bytes_accessed = xp.size * xp.dtype.itemsize + bp * cp * 4
    for w, b in zip(flat[0::2], flat[1::2]):
        flops += 2 * bp * w.shape[0] * w.shape[1]
        bytes_accessed += w.size * w.dtype.itemsize + b.size * b.dtype.itemsize
    ce = pl.CostEstimate(flops=flops, transcendentals=0,
                         bytes_accessed=bytes_accessed)

    out = pl.pallas_call(
        disnet_kernel,
        out_shape=jax.ShapeDtypeStruct((bp, cp), jnp.float32),
        grid_spec=pltpu.PrefetchScalarGridSpec(
            num_scalar_prefetch=0,
            grid=grid,
            in_specs=in_specs,
            out_specs=out_specs,
        ),
        compiler_params=pltpu.CompilerParams(
            dimension_semantics=("parallel",)),
        cost_estimate=ce,
    )(xp, *flat)

    return out[:B, :C].astype(x.dtype)


# ---------------------------------------------------------------------------
# Synthetic parameters + reference (bf16-matmul-matched so tolerances are tight)
# ---------------------------------------------------------------------------
def make_params(key, z_dim, N, C, dtype=jnp.float32):
    """Deterministic synthetic parameters (normal(0, 0.02) weights, zero bias)."""
    dims = [z_dim] + list(N) + [C]
    params = []
    for i in range(len(dims) - 1):
        key, wk = jax.random.split(key)
        w = 0.02 * jax.random.normal(wk, (dims[i + 1], dims[i]), dtype=dtype)
        b = jnp.zeros((dims[i + 1],), dtype=dtype)
        params.append((w, b))
    return params


def reference_forward(x, params, dot_dtype=jnp.bfloat16):
    h = x.astype(jnp.float32)
    n = len(params)
    for i, (w, b) in enumerate(params):
        w = jnp.asarray(w, jnp.float32)
        h = jnp.dot(h.astype(dot_dtype), w.T.astype(dot_dtype),
                    preferred_element_type=jnp.float32) + jnp.asarray(b, jnp.float32)
        if i < n - 1:
            h = jnp.where(h > 0, h, NEG_SLOPE * h)
    return h.astype(x.dtype)


if __name__ == "__main__":
    # Small shapes consistent with the module: x is (batch, z_dim).
    batch, z_dim, N, C = 8, 131, (64, 48, 32), 1

    key = jax.random.PRNGKey(0)
    key, xk = jax.random.split(key)
    x = jax.random.normal(xk, (batch, z_dim), dtype=jnp.float32)
    params = make_params(key, z_dim, N, C)

    prepared = prepare_params(params)          # one-time pad/transpose/cast
    out = disnet_forward(x, prepared)
    out = jax.block_until_ready(out)

    ref = reference_forward(x, params)
    assert out.shape == (batch, C), out.shape
    assert jnp.allclose(out, ref, atol=1e-4, rtol=1e-3), "mismatch vs JAX reference"

    print("KERNEL_OK")
</pallas_src>

<mosaic_0001>
module attributes {stable_mosaic.version = 11 : i64} {
  func.func @disnet_kernel(%arg0: i32, %arg1: memref<8x256xf32, #tpu.memory_space<vmem>>, %arg2: memref<256x128xbf16, #tpu.memory_space<vmem>>, %arg3: memref<1x128xf32, #tpu.memory_space<vmem>>, %arg4: memref<128x128xbf16, #tpu.memory_space<vmem>>, %arg5: memref<1x128xf32, #tpu.memory_space<vmem>>, %arg6: memref<128x128xbf16, #tpu.memory_space<vmem>>, %arg7: memref<1x128xf32, #tpu.memory_space<vmem>>, %arg8: memref<128x128xbf16, #tpu.memory_space<vmem>>, %arg9: memref<1x128xf32, #tpu.memory_space<vmem>>, %arg10: memref<8x128xf32, #tpu.memory_space<vmem>>) attributes {dimension_semantics = [#tpu.dimension_semantics<parallel>], iteration_bounds = array<i64: 1>, scalar_prefetch = 0 : i64, scratch_operands = 0 : i64, tpu.core_type = #tpu.core_type<tc>, window_params = [{transform_indices = @transform_0, window_bounds = array<i64: 8, 256>}, {pipeline_mode = #tpu.pipeline_mode<synchronous>, transform_indices = @transform_1, window_bounds = array<i64: 256, 128>}, {pipeline_mode = #tpu.pipeline_mode<synchronous>, transform_indices = @transform_2, window_bounds = array<i64: 1, 128>}, {pipeline_mode = #tpu.pipeline_mode<synchronous>, transform_indices = @transform_3, window_bounds = array<i64: 128, 128>}, {pipeline_mode = #tpu.pipeline_mode<synchronous>, transform_indices = @transform_4, window_bounds = array<i64: 1, 128>}, {pipeline_mode = #tpu.pipeline_mode<synchronous>, transform_indices = @transform_5, window_bounds = array<i64: 128, 128>}, {pipeline_mode = #tpu.pipeline_mode<synchronous>, transform_indices = @transform_6, window_bounds = array<i64: 1, 128>}, {pipeline_mode = #tpu.pipeline_mode<synchronous>, transform_indices = @transform_7, window_bounds = array<i64: 128, 128>}, {pipeline_mode = #tpu.pipeline_mode<synchronous>, transform_indices = @transform_8, window_bounds = array<i64: 1, 128>}, {transform_indices = @transform_9, window_bounds = array<i64: 8, 128>}]} {
    %c0 = arith.constant 0 : index
    %c0_0 = arith.constant 0 : index
    %0 = vector.load %arg1[%c0, %c0_0] : memref<8x256xf32, #tpu.memory_space<vmem>>, vector<8x256xf32>
    %1 = arith.truncf %0 : vector<8x256xf32> to vector<8x256xbf16>
    %c0_1 = arith.constant 0 : index
    %c0_2 = arith.constant 0 : index
    %2 = vector.load %arg2[%c0_1, %c0_2] : memref<256x128xbf16, #tpu.memory_space<vmem>>, vector<256x128xbf16>
    %cst = arith.constant dense<0.000000e+00> : vector<8x128xf32>
    %3 = tpu.matmul %1, %2, %cst {dimension_numbers = #tpu.dot_dimension_numbers<[1], [0], [0], [1], [0, 0, 1, 1], [], []>} : vector<8x256xbf16>, vector<256x128xbf16>, vector<8x128xf32> -> vector<8x128xf32>
    %c0_3 = arith.constant 0 : index
    %c0_4 = arith.constant 0 : index
    %4 = vector.load %arg3[%c0_3, %c0_4] : memref<1x128xf32, #tpu.memory_space<vmem>>, vector<1x128xf32>
    %5 = vector.broadcast %4 : vector<1x128xf32> to vector<8x128xf32>
    %6 = arith.addf %3, %5 : vector<8x128xf32>
    %cst_5 = arith.constant 0.000000e+00 : f32
    %7 = vector.broadcast %cst_5 : f32 to vector<8x128xf32>
    %8 = arith.cmpf ogt, %6, %7 : vector<8x128xf32>
    %cst_6 = arith.constant 2.000000e-01 : f32
    %9 = vector.broadcast %cst_6 : f32 to vector<8x128xf32>
    %10 = arith.mulf %9, %6 : vector<8x128xf32>
    %11 = arith.select %8, %6, %10 : vector<8x128xi1>, vector<8x128xf32>
    %12 = arith.truncf %11 : vector<8x128xf32> to vector<8x128xbf16>
    %c0_7 = arith.constant 0 : index
    %c0_8 = arith.constant 0 : index
    %13 = vector.load %arg4[%c0_7, %c0_8] : memref<128x128xbf16, #tpu.memory_space<vmem>>, vector<128x128xbf16>
    %cst_9 = arith.constant dense<0.000000e+00> : vector<8x128xf32>
    %14 = tpu.matmul %12, %13, %cst_9 {dimension_numbers = #tpu.dot_dimension_numbers<[1], [0], [0], [1], [0, 0, 1, 1], [], []>} : vector<8x128xbf16>, vector<128x128xbf16>, vector<8x128xf32> -> vector<8x128xf32>
    %c0_10 = arith.constant 0 : index
    %c0_11 = arith.constant 0 : index
    %15 = vector.load %arg5[%c0_10, %c0_11] : memref<1x128xf32, #tpu.memory_space<vmem>>, vector<1x128xf32>
    %16 = vector.broadcast %15 : vector<1x128xf32> to vector<8x128xf32>
    %17 = arith.addf %14, %16 : vector<8x128xf32>
    %cst_12 = arith.constant 0.000000e+00 : f32
    %18 = vector.broadcast %cst_12 : f32 to vector<8x128xf32>
    %19 = arith.cmpf ogt, %17, %18 : vector<8x128xf32>
    %cst_13 = arith.constant 2.000000e-01 : f32
    %20 = vector.broadcast %cst_13 : f32 to vector<8x128xf32>
    %21 = arith.mulf %20, %17 : vector<8x128xf32>
    %22 = arith.select %19, %17, %21 : vector<8x128xi1>, vector<8x128xf32>
    %23 = arith.truncf %22 : vector<8x128xf32> to vector<8x128xbf16>
    %c0_14 = arith.constant 0 : index
    %c0_15 = arith.constant 0 : index
    %24 = vector.load %arg6[%c0_14, %c0_15] : memref<128x128xbf16, #tpu.memory_space<vmem>>, vector<128x128xbf16>
    %cst_16 = arith.constant dense<0.000000e+00> : vector<8x128xf32>
    %25 = tpu.matmul %23, %24, %cst_16 {dimension_numbers = #tpu.dot_dimension_numbers<[1], [0], [0], [1], [0, 0, 1, 1], [], []>} : vector<8x128xbf16>, vector<128x128xbf16>, vector<8x128xf32> -> vector<8x128xf32>
    %c0_17 = arith.constant 0 : index
    %c0_18 = arith.constant 0 : index
    %26 = vector.load %arg7[%c0_17, %c0_18] : memref<1x128xf32, #tpu.memory_space<vmem>>, vector<1x128xf32>
    %27 = vector.broadcast %26 : vector<1x128xf32> to vector<8x128xf32>
    %28 = arith.addf %25, %27 : vector<8x128xf32>
    %cst_19 = arith.constant 0.000000e+00 : f32
    %29 = vector.broadcast %cst_19 : f32 to vector<8x128xf32>
    %30 = arith.cmpf ogt, %28, %29 : vector<8x128xf32>
    %cst_20 = arith.constant 2.000000e-01 : f32
    %31 = vector.broadcast %cst_20 : f32 to vector<8x128xf32>
    %32 = arith.mulf %31, %28 : vector<8x128xf32>
    %33 = arith.select %30, %28, %32 : vector<8x128xi1>, vector<8x128xf32>
    %34 = arith.truncf %33 : vector<8x128xf32> to vector<8x128xbf16>
    %c0_21 = arith.constant 0 : index
    %c0_22 = arith.constant 0 : index
    %35 = vector.load %arg8[%c0_21, %c0_22] : memref<128x128xbf16, #tpu.memory_space<vmem>>, vector<128x128xbf16>
    %cst_23 = arith.constant dense<0.000000e+00> : vector<8x128xf32>
    %36 = tpu.matmul %34, %35, %cst_23 {dimension_numbers = #tpu.dot_dimension_numbers<[1], [0], [0], [1], [0, 0, 1, 1], [], []>} : vector<8x128xbf16>, vector<128x128xbf16>, vector<8x128xf32> -> vector<8x128xf32>
    %c0_24 = arith.constant 0 : index
    %c0_25 = arith.constant 0 : index
    %37 = vector.load %arg9[%c0_24, %c0_25] : memref<1x128xf32, #tpu.memory_space<vmem>>, vector<1x128xf32>
    %38 = vector.broadcast %37 : vector<1x128xf32> to vector<8x128xf32>
    %39 = arith.addf %36, %38 : vector<8x128xf32>
    %c0_26 = arith.constant 0 : index
    %c0_27 = arith.constant 0 : index
    %40 = vector.load %arg10[%c0_26, %c0_27] : memref<8x128xf32, #tpu.memory_space<vmem>>, vector<8x128xf32>
    tpu.vector_store %arg10[%c0_26, %c0_27], %39 {strides = array<i32>} : memref<8x128xf32, #tpu.memory_space<vmem>>, vector<8x128xf32>,
    return
  }
  func.func @transform_0(%arg0: i32) -> (i32, i32) {
    %c0_i32 = arith.constant 0 : i32
    %c0_i32_0 = arith.constant 0 : i32
    return %arg0, %c0_i32 : i32, i32
  }
  func.func @transform_1(%arg0: i32) -> (i32, i32) {
    %c0_i32 = arith.constant 0 : i32
    %c0_i32_0 = arith.constant 0 : i32
    %c0_i32_1 = arith.constant 0 : i32
    return %c0_i32, %c0_i32_0 : i32, i32
  }
  func.func @transform_2(%arg0: i32) -> (i32, i32) {
    %c0_i32 = arith.constant 0 : i32
    %c0_i32_0 = arith.constant 0 : i32
    %c0_i32_1 = arith.constant 0 : i32
    return %c0_i32, %c0_i32_0 : i32, i32
  }
  func.func @transform_3(%arg0: i32) -> (i32, i32) {
    %c0_i32 = arith.constant 0 : i32
    %c0_i32_0 = arith.constant 0 : i32
    %c0_i32_1 = arith.constant 0 : i32
    return %c0_i32, %c0_i32_0 : i32, i32
  }
  func.func @transform_4(%arg0: i32) -> (i32, i32) {
    %c0_i32 = arith.constant 0 : i32
    %c0_i32_0 = arith.constant 0 : i32
    %c0_i32_1 = arith.constant 0 : i32
    return %c0_i32, %c0_i32_0 : i32, i32
  }
  func.func @transform_5(%arg0: i32) -> (i32, i32) {
    %c0_i32 = arith.constant 0 : i32
    %c0_i32_0 = arith.constant 0 : i32
    %c0_i32_1 = arith.constant 0 : i32
    return %c0_i32, %c0_i32_0 : i32, i32
  }
  func.func @transform_6(%arg0: i32) -> (i32, i32) {
    %c0_i32 = arith.constant 0 : i32
    %c0_i32_0 = arith.constant 0 : i32
    %c0_i32_1 = arith.constant 0 : i32
    return %c0_i32, %c0_i32_0 : i32, i32
  }
  func.func @transform_7(%arg0: i32) -> (i32, i32) {
    %c0_i32 = arith.constant 0 : i32
    %c0_i32_0 = arith.constant 0 : i32
    %c0_i32_1 = arith.constant 0 : i32
    return %c0_i32, %c0_i32_0 : i32, i32
  }
  func.func @transform_8(%arg0: i32) -> (i32, i32) {
    %c0_i32 = arith.constant 0 : i32
    %c0_i32_0 = arith.constant 0 : i32
    %c0_i32_1 = arith.constant 0 : i32
    return %c0_i32, %c0_i32_0 : i32, i32
  }
  func.func @transform_9(%arg0: i32) -> (i32, i32) {
    %c0_i32 = arith.constant 0 : i32
    %c0_i32_0 = arith.constant 0 : i32
    return %arg0, %c0_i32 : i32, i32
  }
}

</mosaic_0001>

<llo_original>
// kernel: tpu_custom_call.1
$region0: #{tpu_custom_call.1}
  #allocation0 [shape = 'u32[]', space=smem, size = 0x4, offset = 0x4, fixed_abs, tag = 'smem constant byte address 0x4 - core index']
  #allocation1 [shape = 'u32[144,128]{1,0:T(1,128)}', space=vmem, size = 0x12000, scoped, tag = 'internal scratch']
  %s0 = inlined_call_operand.hbm [shape: f32[8,256], index: 0, kind: input, shape index: {}]
  %s1 = inlined_call_operand.hbm [shape: bf16[256,128], index: 1, kind: input, shape index: {}]
  %s2 = inlined_call_operand.vmem [shape: f32[1,128], index: 2, kind: input, shape index: {}]
  %s3 = inlined_call_operand.hbm [shape: bf16[128,128], index: 3, kind: input, shape index: {}]
  %s4 = inlined_call_operand.vmem [shape: f32[1,128], index: 4, kind: input, shape index: {}]
  %s5 = inlined_call_operand.hbm [shape: bf16[128,128], index: 5, kind: input, shape index: {}]
  %s6 = inlined_call_operand.vmem [shape: f32[1,128], index: 6, kind: input, shape index: {}]
  %s7 = inlined_call_operand.hbm [shape: bf16[128,128], index: 7, kind: input, shape index: {}]
  %s8 = inlined_call_operand.vmem [shape: f32[1,128], index: 8, kind: input, shape index: {}]
  %s9 = inlined_call_operand.hbm [shape: f32[8,128], index: 9, kind: output, shape index: {}]
  %s10 = sld [smem:[#allocation0]]
  $region66: #{tpu_custom_call.1} parent=0
    _
  %s12 = ssub.s32 1, %s10
  %s13 = scalar_select 0, %s12, %s10
  $region1: #{tpu_custom_call.1} parent=0
    #allocation2 [shape = 'u8[8192]{0}', space=vmem, size = 0x2000, scoped, tag = 'input window, operand 0, single buffered']
    #allocation3 [shape = 's32[1]{0}', space=sflag, size = 0x4, scoped, tag = 'scoped memory for tpu_custom_call.1']
    #allocation4 [shape = 's32[1]{0}', space=sflag, size = 0x4, scoped, tag = 'scoped memory for tpu_custom_call.1']
    #allocation5 [shape = 'u8[65536]{0}', space=vmem, size = 0x10000, scoped, tag = 'input window, operand 1, single buffered']
    #allocation6 [shape = 's32[1]{0}', space=sflag, size = 0x4, scoped, tag = 'scoped memory for tpu_custom_call.1']
    #allocation7 [shape = 'u8[32768]{0}', space=vmem, size = 0x8000, scoped, tag = 'input window, operand 3, single buffered']
    #allocation8 [shape = 'u8[32768]{0}', space=vmem, size = 0x8000, scoped, tag = 'input window, operand 5, single buffered']
    #allocation9 [shape = 's32[1]{0}', space=sflag, size = 0x4, scoped, tag = 'scoped memory for tpu_custom_call.1']
    #allocation10 [shape = 'u8[32768]{0}', space=vmem, size = 0x8000, scoped, tag = 'input window, operand 7, single buffered']
    #allocation11 [shape = 'u8[4096]{0}', space=vmem, size = 0x1000, scoped, tag = 'output window, operand 0, single buffered']
    %14 = vsyncpa [#allocation3], 0
    %15 = vsyncpa [#allocation6], 0
    %16 = vsyncpa [#allocation9], 0
    %17 = vsyncpa [#allocation4], 0
    // Predicated region
    $region2: #{tpu_custom_call.1} parent=1 // pred_check
      _
    $region3: #{tpu_custom_call.1} parent=1 // pred_check_branch
      %19 = sbr.rel (0) target = $region5
    $region4: #{tpu_custom_call.1} parent=1 // pred_region
      %s21 = ssub.s32 256, 256
      %22 = vsyncadd [#allocation3], %s21
      %s24 = sshll.u32 [#allocation2], 4
      %s25 = int_to_ptr.vmem [resolvable:$true] %s24
      %27 = dma.hbm_to_vmem [thread:$0]  %s0, 256, %s25, [#allocation3]
    $region5: #{tpu_custom_call.1} parent=1 // pred_fallthru
      _
    // Predicated region
    $region6: #{tpu_custom_call.1} parent=1 // pred_check
      _
    $region7: #{tpu_custom_call.1} parent=1 // pred_check_branch
      %29 = sbr.rel (0) target = $region9
    $region8: #{tpu_custom_call.1} parent=1 // pred_region
      %s31 = ssub.s32 2048, 2048
      %32 = vsyncadd [#allocation6], %s31
      %s33 = sshll.u32 [#allocation5], 4
      %s34 = int_to_ptr.vmem [resolvable:$true] %s33
      %39 = dma.hbm_to_vmem [thread:$0]  %s1, 2048, %s34, [#allocation6], 64, 64, 4
    $region9: #{tpu_custom_call.1} parent=1 // pred_fallthru
      _
    // Predicated region
    $region10: #{tpu_custom_call.1} parent=1 // pred_check
      _
    $region11: #{tpu_custom_call.1} parent=1 // pred_check_branch
      %41 = sbr.rel (0) target = $region13
    $region12: #{tpu_custom_call.1} parent=1 // pred_region
      _
    $region13: #{tpu_custom_call.1} parent=1 // pred_fallthru
      _
    // Predicated region
    $region14: #{tpu_custom_call.1} parent=1 // pred_check
      _
    $region15: #{tpu_custom_call.1} parent=1 // pred_check_branch
      %43 = sbr.rel (0) target = $region17
    $region16: #{tpu_custom_call.1} parent=1 // pred_region
      %s45 = ssub.s32 1024, 1024
      %46 = vsyncadd [#allocation6], %s45
      %s47 = sshll.u32 [#allocation7], 4
      %s48 = int_to_ptr.vmem [resolvable:$true] %s47
      %53 = dma.hbm_to_vmem [thread:$0]  %s3, 1024, %s48, [#allocation6], 64, 64, 4
    $region17: #{tpu_custom_call.1} parent=1 // pred_fallthru
      _
    // Predicated region
    $region18: #{tpu_custom_call.1} parent=1 // pred_check
      _
    $region19: #{tpu_custom_call.1} parent=1 // pred_check_branch
      %55 = sbr.rel (0) target = $region21
    $region20: #{tpu_custom_call.1} parent=1 // pred_region
      _
    $region21: #{tpu_custom_call.1} parent=1 // pred_fallthru
      _
    // Predicated region
    $region22: #{tpu_custom_call.1} parent=1 // pred_check
      _
    $region23: #{tpu_custom_call.1} parent=1 // pred_check_branch
      %57 = sbr.rel (0) target = $region25
    $region24: #{tpu_custom_call.1} parent=1 // pred_region
      %s59 = ssub.s32 1024, 1024
      %60 = vsyncadd [#allocation9], %s59
      %s61 = sshll.u32 [#allocation8], 4
      %s62 = int_to_ptr.vmem [resolvable:$true] %s61
      %67 = dma.hbm_to_vmem [thread:$0]  %s5, 1024, %s62, [#allocation9], 64, 64, 4
    $region25: #{tpu_custom_call.1} parent=1 // pred_fallthru
      _
    // Predicated region
    $region26: #{tpu_custom_call.1} parent=1 // pred_check
      _
    $region27: #{tpu_custom_call.1} parent=1 // pred_check_branch
      %69 = sbr.rel (0) target = $region29
    $region28: #{tpu_custom_call.1} parent=1 // pred_region
      _
    $region29: #{tpu_custom_call.1} parent=1 // pred_fallthru
      _
    // Predicated region
    $region30: #{tpu_custom_call.1} parent=1 // pred_check
      _
    $region31: #{tpu_custom_call.1} parent=1 // pred_check_branch
      %71 = sbr.rel (0) target = $region33
    $region32: #{tpu_custom_call.1} parent=1 // pred_region
      %s73 = ssub.s32 1024, 1024
      %74 = vsyncadd [#allocation9], %s73
      %s75 = sshll.u32 [#allocation10], 4
      %s76 = int_to_ptr.vmem [resolvable:$true] %s75
      %81 = dma.hbm_to_vmem [thread:$0]  %s7, 1024, %s76, [#allocation9], 64, 64, 4
    $region33: #{tpu_custom_call.1} parent=1 // pred_fallthru
      _
    // Predicated region
    $region34: #{tpu_custom_call.1} parent=1 // pred_check
      _
    $region35: #{tpu_custom_call.1} parent=1 // pred_check_branch
      %83 = sbr.rel (0) target = $region37
    $region36: #{tpu_custom_call.1} parent=1 // pred_region
      _
    $region37: #{tpu_custom_call.1} parent=1 // pred_fallthru
      _
    // Predicated region
    $region38: #{tpu_custom_call.1} parent=1 // pred_check
      _
    $region39: #{tpu_custom_call.1} parent=1 // pred_check_branch
      %85 = sbr.rel (0) target = $region41
    $region40: #{tpu_custom_call.1} parent=1 // pred_region
      %86 = dma.done [#allocation3], 256
    $region41: #{tpu_custom_call.1} parent=1 // pred_fallthru
      _
    // Predicated region
    $region42: #{tpu_custom_call.1} parent=1 // pred_check
      _
    $region43: #{tpu_custom_call.1} parent=1 // pred_check_branch
      %88 = sbr.rel (0) target = $region45
    $region44: #{tpu_custom_call.1} parent=1 // pred_region
      %89 = dma.done [#allocation6], 2048
    $region45: #{tpu_custom_call.1} parent=1 // pred_fallthru
      _
    // Predicated region
    $region46: #{tpu_custom_call.1} parent=1 // pred_check
      _
    $region47: #{tpu_custom_call.1} parent=1 // pred_check_branch
      %91 = sbr.rel (0) target = $region49
    $region48: #{tpu_custom_call.1} parent=1 // pred_region
      %92 = dma.done [#allocation6], 1024
    $region49: #{tpu_custom_call.1} parent=1 // pred_fallthru
      _
    // Predicated region
    $region50: #{tpu_custom_call.1} parent=1 // pred_check
      _
    $region51: #{tpu_custom_call.1} parent=1 // pred_check_branch
      %94 = sbr.rel (0) target = $region53
    $region52: #{tpu_custom_call.1} parent=1 // pred_region
      %95 = dma.done [#allocation9], 1024
    $region53: #{tpu_custom_call.1} parent=1 // pred_fallthru
      _
    // Predicated region
    $region54: #{tpu_custom_call.1} parent=1 // pred_check
      _
    $region55: #{tpu_custom_call.1} parent=1 // pred_check_branch
      %97 = sbr.rel (0) target = $region57
    $region56: #{tpu_custom_call.1} parent=1 // pred_region
      %98 = dma.done [#allocation9], 1024
    $region57: #{tpu_custom_call.1} parent=1 // pred_fallthru
      _
    %v100 = vld [vmem:[#allocation2] sm:$0xff]
    %v101 = vld [vmem:[#allocation2 + $0x8] sm:$0xff]
    %v102 = vpack.c.bf16 %v100, %v100
    %v103 = vpack.c.bf16 %v101, %v101
    %v104 = vld [vmem:[#allocation5] sm:$0xf]
    %v105 = vld [vmem:[#allocation5 + $0x4] sm:$0xf]
    %v106 = vld [vmem:[#allocation5 + $0x8] sm:$0xf]
    %v107 = vld [vmem:[#allocation5 + $0xc] sm:$0xf]
    %v108 = vld [vmem:[#allocation5 + $0x10] sm:$0xf]
    %v109 = vld [vmem:[#allocation5 + $0x14] sm:$0xf]
    %v110 = vld [vmem:[#allocation5 + $0x18] sm:$0xf]
    %v111 = vld [vmem:[#allocation5 + $0x1c] sm:$0xf]
    %v112 = vld [vmem:[#allocation5 + $0x20] sm:$0xf]
    %v113 = vld [vmem:[#allocation5 + $0x24] sm:$0xf]
    %v114 = vld [vmem:[#allocation5 + $0x28] sm:$0xf]
    %v115 = vld [vmem:[#allocation5 + $0x2c] sm:$0xf]
    %v116 = vld [vmem:[#allocation5 + $0x30] sm:$0xf]
    %v117 = vld [vmem:[#allocation5 + $0x34] sm:$0xf]
    %v118 = vld [vmem:[#allocation5 + $0x38] sm:$0xf]
    %v119 = vld [vmem:[#allocation5 + $0x3c] sm:$0xf]
    %v120 = vld [vmem:[#allocation5 + $0x40] sm:$0xf]
    %v121 = vld [vmem:[#allocation5 + $0x44] sm:$0xf]
    %v122 = vld [vmem:[#allocation5 + $0x48] sm:$0xf]
    %v123 = vld [vmem:[#allocation5 + $0x4c] sm:$0xf]
    %v124 = vld [vmem:[#allocation5 + $0x50] sm:$0xf]
    %v125 = vld [vmem:[#allocation5 + $0x54] sm:$0xf]
    %v126 = vld [vmem:[#allocation5 + $0x58] sm:$0xf]
    %v127 = vld [vmem:[#allocation5 + $0x5c] sm:$0xf]
    %v128 = vld [vmem:[#allocation5 + $0x60] sm:$0xf]
    %v129 = vld [vmem:[#allocation5 + $0x64] sm:$0xf]
    %v130 = vld [vmem:[#allocation5 + $0x68] sm:$0xf]
    %v131 = vld [vmem:[#allocation5 + $0x6c] sm:$0xf]
    %v132 = vld [vmem:[#allocation5 + $0x70] sm:$0xf]
    %v133 = vld [vmem:[#allocation5 + $0x74] sm:$0xf]
    %v134 = vld [vmem:[#allocation5 + $0x78] sm:$0xf]
    %v135 = vld [vmem:[#allocation5 + $0x7c] sm:$0xf]
    %v136 = vld [vmem:[%s2] sm:$0x1]
    %v138 = vlaneseq
    %v139 = vshrl.u32 %v138, 7
    %v140 = vsub.s32 0, %v139
    %v141 = vrot.slane %v136, %v140
    %v175 = vunpack.c.l.b16 %v104
    %v176 = vunpack.c.l.b16 %v105
    %v177 = vunpack.c.l.b16 %v106
    %v178 = vunpack.c.l.b16 %v107
    %v179 = vunpack.c.l.b16 %v108
    %v180 = vunpack.c.l.b16 %v109
    %v181 = vunpack.c.l.b16 %v110
    %v182 = vunpack.c.l.b16 %v111
    %v183 = vunpack.c.l.b16 %v112
    %v184 = vunpack.c.l.b16 %v113
    %v185 = vunpack.c.l.b16 %v114
    %v186 = vunpack.c.l.b16 %v115
    %v187 = vunpack.c.l.b16 %v116
    %v188 = vunpack.c.l.b16 %v117
    %v189 = vunpack.c.l.b16 %v118
    %v190 = vunpack.c.l.b16 %v119
    %v191 = vunpack.c.l.b16 %v120
    %v192 = vunpack.c.l.b16 %v121
    %v193 = vunpack.c.l.b16 %v122
    %v194 = vunpack.c.l.b16 %v123
    %v195 = vunpack.c.l.b16 %v124
    %v196 = vunpack.c.l.b16 %v125
    %v197 = vunpack.c.l.b16 %v126
    %v198 = vunpack.c.l.b16 %v127
    %v199 = vunpack.c.l.b16 %v128
    %v200 = vunpack.c.l.b16 %v129
    %v201 = vunpack.c.l.b16 %v130
    %v202 = vunpack.c.l.b16 %v131
    %v203 = vunpack.c.l.b16 %v132
    %v204 = vunpack.c.l.b16 %v133
    %v205 = vunpack.c.l.b16 %v134
    %v206 = vunpack.c.l.b16 %v135
    %v207 = vpack.c.b16 %v176, %v175
    %v208 = vpack.c.b16 %v178, %v177
    %v209 = vpack.c.b16 %v180, %v179
    %v210 = vpack.c.b16 %v182, %v181
    %v211 = vpack.c.b16 %v184, %v183
    %v212 = vpack.c.b16 %v186, %v185
    %v213 = vpack.c.b16 %v188, %v187
    %v214 = vpack.c.b16 %v190, %v189
    %v215 = vpack.c.b16 %v192, %v191
    %v216 = vpack.c.b16 %v194, %v193
    %v217 = vpack.c.b16 %v196, %v195
    %v218 = vpack.c.b16 %v198, %v197
    %v219 = vpack.c.b16 %v200, %v199
    %v220 = vpack.c.b16 %v202, %v201
    %v221 = vpack.c.b16 %v204, %v203
    %v222 = vpack.c.b16 %v206, %v205
    %239 = vmatprep.subr.bf16.mxu0 0
    %240 = vmatpush1.bf16.msra.mxu0 %v207
    %241 = vmatprep.subr.bf16.mxu0 0
    %242 = vmatpush1.bf16.msra.mxu0 %v208
    %243 = vmatprep.subr.bf16.mxu0 0
    %244 = vmatpush1.bf16.msra.mxu0 %v209
    %245 = vmatprep.subr.bf16.mxu0 0
    %246 = vmatpush1.bf16.msra.mxu0 %v210
    %247 = vmatprep.subr.bf16.mxu0 0
    %248 = vmatpush1.bf16.msra.mxu0 %v211
    %249 = vmatprep.subr.bf16.mxu0 0
    %250 = vmatpush1.bf16.msra.mxu0 %v212
    %251 = vmatprep.subr.bf16.mxu0 0
    %252 = vmatpush1.bf16.msra.mxu0 %v213
    %253 = vmatprep.subr.bf16.mxu0 0
    %254 = vmatpush1.bf16.msra.mxu0 %v214
    %255 = vmatprep.subr.bf16.mxu0 0
    %256 = vmatpush1.bf16.msra.mxu0 %v215
    %257 = vmatprep.subr.bf16.mxu0 0
    %258 = vmatpush1.bf16.msra.mxu0 %v216
    %259 = vmatprep.subr.bf16.mxu0 0
    %260 = vmatpush1.bf16.msra.mxu0 %v217
    %261 = vmatprep.subr.bf16.mxu0 0
    %262 = vmatpush1.bf16.msra.mxu0 %v218
    %263 = vmatprep.subr.bf16.mxu0 0
    %264 = vmatpush1.bf16.msra.mxu0 %v219
    %265 = vmatprep.subr.bf16.mxu0 0
    %266 = vmatpush1.bf16.msra.mxu0 %v220
    %267 = vmatprep.subr.bf16.mxu0 0
    %268 = vmatpush1.bf16.msra.mxu0 %v221
    %269 = vmatprep.subr.bf16.mxu0 0
    %270 = vmatpush1.bf16.msra.mxu0 %v222
    %271 = vmatprep.mubr.bf16.mxu0 %v103
    %272 = vmatmul.mubr.bf16.gmra.mrb[0].mxu0 %v102
    %v273 = vpop.f32.mrb[0].mxu0
    %v274 = vadd.f32 %v141, %v273
    %v275 = vpop.f32.mrb[0].mxu0
    %v276 = vpop.f32.mrb[0].mxu0
    %v277 = vpop.f32.mrb[0].mxu0
    %278 = vdwg.mxu0
    %vm279 = vcmp.gt.f32.partialorder %v274, 0.0
    %v280 = vmul.f32 %v274, 0.2
    %v281 = vsel %vm279, %v274, %v280
    %v282 = vpack.c.bf16 %v281, %v281
    %v283 = vld [vmem:[#allocation7] sm:$0xf]
    %v284 = vld [vmem:[#allocation7 + $0x4] sm:$0xf]
    %v285 = vld [vmem:[#allocation7 + $0x8] sm:$0xf]
    %v286 = vld [vmem:[#allocation7 + $0xc] sm:$0xf]
    %v287 = vld [vmem:[#allocation7 + $0x10] sm:$0xf]
    %v288 = vld [vmem:[#allocation7 + $0x14] sm:$0xf]
    %v289 = vld [vmem:[#allocation7 + $0x18] sm:$0xf]
    %v290 = vld [vmem:[#allocation7 + $0x1c] sm:$0xf]
    %v291 = vld [vmem:[#allocation7 + $0x20] sm:$0xf]
    %v292 = vld [vmem:[#allocation7 + $0x24] sm:$0xf]
    %v293 = vld [vmem:[#allocation7 + $0x28] sm:$0xf]
    %v294 = vld [vmem:[#allocation7 + $0x2c] sm:$0xf]
    %v295 = vld [vmem:[#allocation7 + $0x30] sm:$0xf]
    %v296 = vld [vmem:[#allocation7 + $0x34] sm:$0xf]
    %v297 = vld [vmem:[#allocation7 + $0x38] sm:$0xf]
    %v298 = vld [vmem:[#allocation7 + $0x3c] sm:$0xf]
    %v299 = vld [vmem:[%s4] sm:$0x1]
    %v301 = vlaneseq
    %v302 = vshrl.u32 %v301, 7
    %v303 = vsub.s32 0, %v302
    %v304 = vrot.slane %v299, %v303
    %v322 = vunpack.c.l.b16 %v283
    %v323 = vunpack.c.l.b16 %v284
    %v324 = vunpack.c.l.b16 %v285
    %v325 = vunpack.c.l.b16 %v286
    %v326 = vunpack.c.l.b16 %v287
    %v327 = vunpack.c.l.b16 %v288
    %v328 = vunpack.c.l.b16 %v289
    %v329 = vunpack.c.l.b16 %v290
    %v330 = vunpack.c.l.b16 %v291
    %v331 = vunpack.c.l.b16 %v292
    %v332 = vunpack.c.l.b16 %v293
    %v333 = vunpack.c.l.b16 %v294
    %v334 = vunpack.c.l.b16 %v295
    %v335 = vunpack.c.l.b16 %v296
    %v336 = vunpack.c.l.b16 %v297
    %v337 = vunpack.c.l.b16 %v298
    %v338 = vpack.c.b16 %v323, %v322
    %v339 = vpack.c.b16 %v325, %v324
    %v340 = vpack.c.b16 %v327, %v326
    %v341 = vpack.c.b16 %v329, %v328
    %v342 = vpack.c.b16 %v331, %v330
    %v343 = vpack.c.b16 %v333, %v332
    %v344 = vpack.c.b16 %v335, %v334
    %v345 = vpack.c.b16 %v337, %v336
    %354 = vmatprep.subr.bf16.mxu0 0
    %355 = vmatpush1.bf16.msra.mxu0 %v338
    %356 = vmatprep.subr.bf16.mxu0 0
    %357 = vmatpush1.bf16.msra.mxu0 %v339
    %358 = vmatprep.subr.bf16.mxu0 0
    %359 = vmatpush1.bf16.msra.mxu0 %v340
    %360 = vmatprep.subr.bf16.mxu0 0
    %361 = vmatpush1.bf16.msra.mxu0 %v341
    %362 = vmatprep.subr.bf16.mxu0 0
    %363 = vmatpush1.bf16.msra.mxu0 %v342
    %364 = vmatprep.subr.bf16.mxu0 0
    %365 = vmatpush1.bf16.msra.mxu0 %v343
    %366 = vmatprep.subr.bf16.mxu0 0
    %367 = vmatpush1.bf16.msra.mxu0 %v344
    %368 = vmatprep.subr.bf16.mxu0 0
    %369 = vmatpush1.bf16.msra.mxu0 %v345
    %370 = vmatprep.subr.bf16.mxu0 0
    %371 = vmatpush1.bf16.msra.mxu0 0
    %372 = vmatprep.subr.bf16.mxu0 0
    %373 = vmatpush1.bf16.msra.mxu0 0
    %374 = vmatprep.subr.bf16.mxu0 0
    %375 = vmatpush1.bf16.msra.mxu0 0
    %376 = vmatprep.subr.bf16.mxu0 0
    %377 = vmatpush1.bf16.msra.mxu0 0
    %378 = vmatprep.subr.bf16.mxu0 0
    %379 = vmatpush1.bf16.msra.mxu0 0
    %380 = vmatprep.subr.bf16.mxu0 0
    %381 = vmatpush1.bf16.msra.mxu0 0
    %382 = vmatprep.subr.bf16.mxu0 0
    %383 = vmatpush1.bf16.msra.mxu0 0
    %384 = vmatprep.subr.bf16.mxu0 0
    %385 = vmatpush1.bf16.msra.mxu0 0
    %386 = vmatprep.mubr.bf16.mxu0 0
    %387 = vmatmul.mubr.bf16.gmra.mrb[0].mxu0 %v282
    %v388 = vpop.f32.mrb[0].mxu0
    %v389 = vadd.f32 %v304, %v388
    %v390 = vpop.f32.mrb[0].mxu0
    %v391 = vpop.f32.mrb[0].mxu0
    %v392 = vpop.f32.mrb[0].mxu0
    %393 = vdwg.mxu0
    %vm394 = vcmp.gt.f32.partialorder %v389, 0.0
    %v395 = vmul.f32 %v389, 0.2
    %v396 = vsel %vm394, %v389, %v395
    %v397 = vpack.c.bf16 %v396, %v396
    %v398 = vld [vmem:[#allocation8] sm:$0xf]
    %v399 = vld [vmem:[#allocation8 + $0x4] sm:$0xf]
    %v400 = vld [vmem:[#allocation8 + $0x8] sm:$0xf]
    %v401 = vld [vmem:[#allocation8 + $0xc] sm:$0xf]
    %v402 = vld [vmem:[#allocation8 + $0x10] sm:$0xf]
    %v403 = vld [vmem:[#allocation8 + $0x14] sm:$0xf]
    %v404 = vld [vmem:[#allocation8 + $0x18] sm:$0xf]
    %v405 = vld [vmem:[#allocation8 + $0x1c] sm:$0xf]
    %v406 = vld [vmem:[#allocation8 + $0x20] sm:$0xf]
    %v407 = vld [vmem:[#allocation8 + $0x24] sm:$0xf]
    %v408 = vld [vmem:[#allocation8 + $0x28] sm:$0xf]
    %v409 = vld [vmem:[#allocation8 + $0x2c] sm:$0xf]
    %v410 = vld [vmem:[#allocation8 + $0x30] sm:$0xf]
    %v411 = vld [vmem:[#allocation8 + $0x34] sm:$0xf]
    %v412 = vld [vmem:[#allocation8 + $0x38] sm:$0xf]
    %v413 = vld [vmem:[#allocation8 + $0x3c] sm:$0xf]
    %v414 = vld [vmem:[%s6] sm:$0x1]
    %v416 = vlaneseq
    %v417 = vshrl.u32 %v416, 7
    %v418 = vsub.s32 0, %v417
    %v419 = vrot.slane %v414, %v418
    %v437 = vunpack.c.l.b16 %v398
    %v438 = vunpack.c.l.b16 %v399
    %v439 = vunpack.c.l.b16 %v400
    %v440 = vunpack.c.l.b16 %v401
    %v441 = vunpack.c.l.b16 %v402
    %v442 = vunpack.c.l.b16 %v403
    %v443 = vunpack.c.l.b16 %v404
    %v444 = vunpack.c.l.b16 %v405
    %v445 = vunpack.c.l.b16 %v406
    %v446 = vunpack.c.l.b16 %v407
    %v447 = vunpack.c.l.b16 %v408
    %v448 = vunpack.c.l.b16 %v409
    %v449 = vunpack.c.l.b16 %v410
    %v450 = vunpack.c.l.b16 %v411
    %v451 = vunpack.c.l.b16 %v412
    %v452 = vunpack.c.l.b16 %v413
    %v453 = vpack.c.b16 %v438, %v437
    %v454 = vpack.c.b16 %v440, %v439
    %v455 = vpack.c.b16 %v442, %v441
    %v456 = vpack.c.b16 %v444, %v443
    %v457 = vpack.c.b16 %v446, %v445
    %v458 = vpack.c.b16 %v448, %v447
    %v459 = vpack.c.b16 %v450, %v449
    %v460 = vpack.c.b16 %v452, %v451
    %469 = vmatprep.subr.bf16.mxu0 0
    %470 = vmatpush1.bf16.msra.mxu0 %v453
    %471 = vmatprep.subr.bf16.mxu0 0
    %472 = vmatpush1.bf16.msra.mxu0 %v454
    %473 = vmatprep.subr.bf16.mxu0 0
    %474 = vmatpush1.bf16.msra.mxu0 %v455
    %475 = vmatprep.subr.bf16.mxu0 0
    %476 = vmatpush1.bf16.msra.mxu0 %v456
    %477 = vmatprep.subr.bf16.mxu0 0
    %478 = vmatpush1.bf16.msra.mxu0 %v457
    %479 = vmatprep.subr.bf16.mxu0 0
    %480 = vmatpush1.bf16.msra.mxu0 %v458
    %481 = vmatprep.subr.bf16.mxu0 0
    %482 = vmatpush1.bf16.msra.mxu0 %v459
    %483 = vmatprep.subr.bf16.mxu0 0
    %484 = vmatpush1.bf16.msra.mxu0 %v460
    %485 = vmatprep.subr.bf16.mxu0 0
    %486 = vmatpush1.bf16.msra.mxu0 0
    %487 = vmatprep.subr.bf16.mxu0 0
    %488 = vmatpush1.bf16.msra.mxu0 0
    %489 = vmatprep.subr.bf16.mxu0 0
    %490 = vmatpush1.bf16.msra.mxu0 0
    %491 = vmatprep.subr.bf16.mxu0 0
    %492 = vmatpush1.bf16.msra.mxu0 0
    %493 = vmatprep.subr.bf16.mxu0 0
    %494 = vmatpush1.bf16.msra.mxu0 0
    %495 = vmatprep.subr.bf16.mxu0 0
    %496 = vmatpush1.bf16.msra.mxu0 0
    %497 = vmatprep.subr.bf16.mxu0 0
    %498 = vmatpush1.bf16.msra.mxu0 0
    %499 = vmatprep.subr.bf16.mxu0 0
    %500 = vmatpush1.bf16.msra.mxu0 0
    %501 = vmatprep.mubr.bf16.mxu0 0
    %502 = vmatmul.mubr.bf16.gmra.mrb[0].mxu0 %v397
    %v503 = vpop.f32.mrb[0].mxu0
    %v504 = vadd.f32 %v419, %v503
    %v505 = vpop.f32.mrb[0].mxu0
    %v506 = vpop.f32.mrb[0].mxu0
    %v507 = vpop.f32.mrb[0].mxu0
    %508 = vdwg.mxu0
    %vm509 = vcmp.gt.f32.partialorder %v504, 0.0
    %v510 = vmul.f32 %v504, 0.2
    %v511 = vsel %vm509, %v504, %v510
    %v512 = vpack.c.bf16 %v511, %v511
    %v513 = vld [vmem:[#allocation10] sm:$0xf]
    %v514 = vld [vmem:[#allocation10 + $0x4] sm:$0xf]
    %v515 = vld [vmem:[#allocation10 + $0x8] sm:$0xf]
    %v516 = vld [vmem:[#allocation10 + $0xc] sm:$0xf]
    %v517 = vld [vmem:[#allocation10 + $0x10] sm:$0xf]
    %v518 = vld [vmem:[#allocation10 + $0x14] sm:$0xf]
    %v519 = vld [vmem:[#allocation10 + $0x18] sm:$0xf]
    %v520 = vld [vmem:[#allocation10 + $0x1c] sm:$0xf]
    %v521 = vld [vmem:[#allocation10 + $0x20] sm:$0xf]
    %v522 = vld [vmem:[#allocation10 + $0x24] sm:$0xf]
    %v523 = vld [vmem:[#allocation10 + $0x28] sm:$0xf]
    %v524 = vld [vmem:[#allocation10 + $0x2c] sm:$0xf]
    %v525 = vld [vmem:[#allocation10 + $0x30] sm:$0xf]
    %v526 = vld [vmem:[#allocation10 + $0x34] sm:$0xf]
    %v527 = vld [vmem:[#allocation10 + $0x38] sm:$0xf]
    %v528 = vld [vmem:[#allocation10 + $0x3c] sm:$0xf]
    %v529 = vld [vmem:[%s8] sm:$0x1]
    %v531 = vlaneseq
    %v532 = vshrl.u32 %v531, 7
    %v533 = vsub.s32 0, %v532
    %v534 = vrot.slane %v529, %v533
    %v552 = vunpack.c.l.b16 %v513
    %v553 = vunpack.c.l.b16 %v514
    %v554 = vunpack.c.l.b16 %v515
    %v555 = vunpack.c.l.b16 %v516
    %v556 = vunpack.c.l.b16 %v517
    %v557 = vunpack.c.l.b16 %v518
    %v558 = vunpack.c.l.b16 %v519
    %v559 = vunpack.c.l.b16 %v520
    %v560 = vunpack.c.l.b16 %v521
    %v561 = vunpack.c.l.b16 %v522
    %v562 = vunpack.c.l.b16 %v523
    %v563 = vunpack.c.l.b16 %v524
    %v564 = vunpack.c.l.b16 %v525
    %v565 = vunpack.c.l.b16 %v526
    %v566 = vunpack.c.l.b16 %v527
    %v567 = vunpack.c.l.b16 %v528
    %v568 = vpack.c.b16 %v553, %v552
    %v569 = vpack.c.b16 %v555, %v554
    %v570 = vpack.c.b16 %v557, %v556
    %v571 = vpack.c.b16 %v559, %v558
    %v572 = vpack.c.b16 %v561, %v560
    %v573 = vpack.c.b16 %v563, %v562
    %v574 = vpack.c.b16 %v565, %v564
    %v575 = vpack.c.b16 %v567, %v566
    %584 = vmatprep.subr.bf16.mxu0 0
    %585 = vmatpush1.bf16.msra.mxu0 %v568
    %586 = vmatprep.subr.bf16.mxu0 0
    %587 = vmatpush1.bf16.msra.mxu0 %v569
    %588 = vmatprep.subr.bf16.mxu0 0
    %589 = vmatpush1.bf16.msra.mxu0 %v570
    %590 = vmatprep.subr.bf16.mxu0 0
    %591 = vmatpush1.bf16.msra.mxu0 %v571
    %592 = vmatprep.subr.bf16.mxu0 0
    %593 = vmatpush1.bf16.msra.mxu0 %v572
    %594 = vmatprep.subr.bf16.mxu0 0
    %595 = vmatpush1.bf16.msra.mxu0 %v573
    %596 = vmatprep.subr.bf16.mxu0 0
    %597 = vmatpush1.bf16.msra.mxu0 %v574
    %598 = vmatprep.subr.bf16.mxu0 0
    %599 = vmatpush1.bf16.msra.mxu0 %v575
    %600 = vmatprep.subr.bf16.mxu0 0
    %601 = vmatpush1.bf16.msra.mxu0 0
    %602 = vmatprep.subr.bf16.mxu0 0
    %603 = vmatpush1.bf16.msra.mxu0 0
    %604 = vmatprep.subr.bf16.mxu0 0
    %605 = vmatpush1.bf16.msra.mxu0 0
    %606 = vmatprep.subr.bf16.mxu0 0
    %607 = vmatpush1.bf16.msra.mxu0 0
    %608 = vmatprep.subr.bf16.mxu0 0
    %609 = vmatpush1.bf16.msra.mxu0 0
    %610 = vmatprep.subr.bf16.mxu0 0
    %611 = vmatpush1.bf16.msra.mxu0 0
    %612 = vmatprep.subr.bf16.mxu0 0
    %613 = vmatpush1.bf16.msra.mxu0 0
    %614 = vmatprep.subr.bf16.mxu0 0
    %615 = vmatpush1.bf16.msra.mxu0 0
    %616 = vmatprep.mubr.bf16.mxu0 0
    %617 = vmatmul.mubr.bf16.gmra.mrb[0].mxu0 %v512
    %v618 = vpop.f32.mrb[0].mxu0
    %v619 = vadd.f32 %v534, %v618
    %v620 = vpop.f32.mrb[0].mxu0
    %v621 = vpop.f32.mrb[0].mxu0
    %v622 = vpop.f32.mrb[0].mxu0
    %623 = vdwg.mxu0
    %624 = vst [vmem:[#allocation11] sm:$0xff] %v619
    // Predicated region
    $region58: #{tpu_custom_call.1} parent=1 // pred_check
      _
    $region59: #{tpu_custom_call.1} parent=1 // pred_check_branch
      %626 = sbr.rel (0) target = $region61
    $region60: #{tpu_custom_call.1} parent=1 // pred_region
      %s628 = ssub.s32 128, 128
      %629 = vsyncadd [#allocation4], %s628
      %s631 = sshll.u32 [#allocation11], 4
      %s632 = int_to_ptr.vmem [resolvable:$true] %s631
      %634 = dma.vmem_to_hbm [thread:$0]  %s632, 128, %s9, [#allocation4]
    $region61: #{tpu_custom_call.1} parent=1 // pred_fallthru
      _
    // Predicated region
    $region62: #{tpu_custom_call.1} parent=1 // pred_check
      _
    $region63: #{tpu_custom_call.1} parent=1 // pred_check_branch
      %636 = sbr.rel (0) target = $region65
    $region64: #{tpu_custom_call.1} parent=1 // pred_region
      %637 = dma.done [#allocation4], 128
    $region65: #{tpu_custom_call.1} parent=1 // pred_fallthru
      _
    %638 = vsyncpa [#allocation3], 1
    %639 = vsyncpa [#allocation6], 1
    %640 = vsyncpa [#allocation9], 1
    %641 = vsyncpa [#allocation4], 1

</llo_original>
